<compile_context>
chip_gen: v7x
topology: tpu7x:2x2x1
jax: 0.10.0
libtpu: 0.0.40
codegen_flags: <defaults>
</compile_context>

<pallas_src>
import functools
import math

import jax
import jax.numpy as jnp
from jax.experimental import pallas as pl
from jax.experimental.pallas import tpu as pltpu


def _round_up(x, m):
    return (x + m - 1) // m * m


# ----------------------------------------------------------------------------
# Kernel
# ----------------------------------------------------------------------------
def _elrg_kernel(x_ref, wcat_ref, wlv_ref, bcat_ref, blv_ref, evar_ref, ev_ref,
                 o_ref, acc_fused, acc_var, *, rank: int):
    k = pl.program_id(2)
    nk = pl.num_programs(2)

    @pl.when(k == 0)
    def _init():
        acc_fused[...] = jnp.zeros_like(acc_fused)
        acc_var[...] = jnp.zeros_like(acc_var)

    x = x_ref[...]                                              # (tb, tk) f32

    # Single wide MXU call covering the mean weight and all `rank` low-rank
    # weights (sqrt(alpha) pre-folded).  bf16 operands, f32 accumulation.
    acc_fused[...] += jnp.dot(x.astype(jnp.bfloat16), wcat_ref[...],
                              preferred_element_type=jnp.float32)

    # Variance path kept in f32: exp(W_log_var) ~ 1e-12, preserve precision.
    acc_var[...] += jnp.dot(x * x, wlv_ref[...],
                            preferred_element_type=jnp.float32)

    @pl.when(k == nk - 1)
    def _finalize():
        tn = acc_var.shape[-1]
        fused = acc_fused[...]                                  # (tb, (1+rank)*tn)
        bcat = bcat_ref[...]                                    # (1+rank, tn)
        ev = ev_ref[...]                                        # (tb, rank)

        # mean path
        out = fused[:, 0:tn] + bcat[0:1, :]
        # low-rank path: cheap VPU broadcast-multiply + add per rank
        for r in range(rank):
            out = out + ev[:, r:r + 1] * (
                fused[:, (r + 1) * tn:(r + 2) * tn] + bcat[r + 1:r + 2, :])
        # variance path
        var = acc_var[...] + blv_ref[...]
        out = out + evar_ref[...] * jnp.sqrt(var)

        o_ref[...] = out.astype(o_ref.dtype)


# ----------------------------------------------------------------------------
# One-time parameter preparation (init-time, not per forward)
# ----------------------------------------------------------------------------
def prepare_elrg_params(w_mean, w_log_var, w_v, b_mean, b_log_var, b_v, alpha):
    D_out, D_in = w_mean.shape
    rank = w_v.shape[0]
    R = 1 + rank
    sqrt_alpha = math.sqrt(float(alpha))

    # ---- tile geometry (lane-dense N, K reduction axis) ---------------------
    tn = 128 if D_out <= 128 else 256
    Np = _round_up(D_out, tn)
    if D_in <= 512:
        tk, K_pad = D_in, D_in
    else:
        tk = 512
        K_pad = _round_up(D_in, tk)
    nj = Np // tn

    # ---- fused mean + low-rank weight, sqrt(alpha) folded, bf16 -------------
    w_all = jnp.concatenate(
        [w_mean[None].astype(jnp.float32),
         sqrt_alpha * w_v.astype(jnp.float32)], axis=0)          # (R, D_out, D_in)
    w_all = jnp.transpose(w_all, (0, 2, 1))                      # (R, D_in, D_out)
    w_all = jnp.pad(w_all, ((0, 0), (0, K_pad - D_in), (0, Np - D_out)))
    # interleave per N-tile so a (tk, R*tn) block holds all R sub-weights of
    # output tile j:  columns = [tile j][replica r][lane t]
    w_cat = jnp.transpose(w_all.reshape(R, K_pad, nj, tn),
                          (1, 2, 0, 3)).reshape(K_pad, nj * R * tn)
    w_cat = w_cat.astype(jnp.bfloat16)

    # ---- variance weight: pre-exp'ed, transposed, zero-padded, f32 ----------
    wlv_exp = jnp.pad(jnp.exp(w_log_var.astype(jnp.float32)).T,
                      ((0, K_pad - D_in), (0, Np - D_out)))

    # ---- fused biases (sqrt(alpha) folded into the low-rank rows) -----------
    b_all = jnp.concatenate(
        [b_mean[None].astype(jnp.float32),
         sqrt_alpha * b_v.astype(jnp.float32)], axis=0)          # (R, D_out)
    b_cat = jnp.pad(b_all, ((0, 0), (0, Np - D_out)))            # (R, Np)
    blv_exp = jnp.pad(jnp.exp(b_log_var.astype(jnp.float32))[None],
                      ((0, 0), (0, Np - D_out)))                 # (1, Np)

    cfg = dict(D_in=D_in, D_out=D_out, rank=rank, R=R,
               tn=tn, Np=Np, tk=tk, K_pad=K_pad)
    return dict(w_cat=w_cat, wlv_exp=wlv_exp, b_cat=b_cat, blv_exp=blv_exp,
                cfg=cfg)


# ----------------------------------------------------------------------------
# Forward wrapper
# ----------------------------------------------------------------------------
def elrg_linear_forward(x, eps_var, eps_v, params):
    cfg = params["cfg"]
    D_in, D_out = cfg["D_in"], cfg["D_out"]
    rank, R = cfg["rank"], cfg["R"]
    tn, Np, tk, K_pad = cfg["tn"], cfg["Np"], cfg["tk"], cfg["K_pad"]

    B = x.shape[0]
    tb = 8 if B <= 8 else min(_round_up(B, 8), 128)
    B_pad = _round_up(B, tb)

    xp = jnp.pad(x.astype(jnp.float32), ((0, B_pad - B), (0, K_pad - D_in)))
    evar_p = jnp.pad(eps_var.astype(jnp.float32),
                     ((0, B_pad - B), (0, Np - D_out)))
    ev_p = jnp.pad(eps_v.astype(jnp.float32), ((0, B_pad - B), (0, 0)))

    grid = (B_pad // tb, Np // tn, K_pad // tk)
    kernel = functools.partial(_elrg_kernel, rank=rank)

    # advisory cost estimate
    flops = 2 * B_pad * K_pad * Np * (R + 1)
    bytes_accessed = (xp.size * 4 + params["w_cat"].size * 2
                      + params["wlv_exp"].size * 4 + params["b_cat"].size * 4
                      + params["blv_exp"].size * 4 + evar_p.size * 4
                      + ev_p.size * 4 + B_pad * Np * 4)
    cost = pl.CostEstimate(flops=flops, transcendentals=B_pad * Np,
                           bytes_accessed=bytes_accessed)

    # VMEM budget: double-buffered input tiles + f32 accumulator scratch.
    tile_bytes = 2 * (tb * tk * 4 + tk * R * tn * 2 + tk * tn * 4
                      + R * tn * 4 + tn * 4 + tb * tn * 4
                      + tb * rank * 4 + tb * tn * 4) \
                 + tb * R * tn * 4 + tb * tn * 4
    vmem_limit = int(min(max(2 * tile_bytes, 32 << 20), 64 << 20))

    out_p = pl.pallas_call(
        kernel,
        out_shape=jax.ShapeDtypeStruct((B_pad, Np), jnp.float32),
        grid_spec=pltpu.PrefetchScalarGridSpec(
            num_scalar_prefetch=0,
            grid=grid,
            in_specs=[
                pl.BlockSpec((tb, tk), lambda i, j, k: (i, k)),      # x (f32)
                pl.BlockSpec((tk, R * tn), lambda i, j, k: (k, j)),  # fused W (bf16)
                pl.BlockSpec((tk, tn), lambda i, j, k: (k, j)),      # exp(Wlv) (f32)
                pl.BlockSpec((R, tn), lambda i, j, k: (0, j)),       # fused biases
                pl.BlockSpec((1, tn), lambda i, j, k: (0, j)),       # exp(blv)
                pl.BlockSpec((tb, tn), lambda i, j, k: (i, j)),      # eps_var
                pl.BlockSpec((tb, rank), lambda i, j, k: (i, 0)),    # eps_v
            ],
            out_specs=pl.BlockSpec((tb, tn), lambda i, j, k: (i, j)),
            scratch_shapes=[
                pltpu.VMEM((tb, R * tn), jnp.float32),   # fused matmul accumulator
                pltpu.VMEM((tb, tn), jnp.float32),       # variance accumulator
            ],
        ),
        compiler_params=pltpu.CompilerParams(
            dimension_semantics=("parallel", "parallel", "arbitrary"),
            vmem_limit_bytes=vmem_limit),
        cost_estimate=cost,
    )(xp, params["w_cat"], params["wlv_exp"], params["b_cat"],
      params["blv_exp"], evar_p, ev_p)

    return out_p[:B, :D_out]


# ----------------------------------------------------------------------------
# Plain-JAX reference mirroring the PyTorch forward()
# ----------------------------------------------------------------------------
def elrg_linear_reference(x, w_mean, w_log_var, w_v, b_mean, b_log_var, b_v,
                          eps_var, eps_v, alpha):
    out = x @ w_mean.T + b_mean
    out = out + eps_var * jnp.sqrt((x ** 2) @ jnp.exp(w_log_var).T
                                   + jnp.exp(b_log_var))
    v_out = jnp.zeros_like(out)
    for k in range(w_v.shape[0]):
        v_out = v_out + eps_v[:, k:k + 1] * (x @ w_v[k].T + b_v[k])
    return out + jnp.sqrt(jnp.float32(alpha)) * v_out


if __name__ == "__main__":
    # Module config (synthetic, deterministic init — no checkpoint loading).
    in_features, out_features = 32, 16
    rank = 2
    alpha = 0.5
    initial_posterior_var = 1e-12
    batch = 8

    key = jax.random.PRNGKey(0)
    k_x, k_wm, k_wv, k_bm, k_bv, k_evar, k_ev = jax.random.split(key, 7)

    # Parameter init (same shapes / spirit as reset_parameters()).
    xavier_std = math.sqrt(2.0 / (in_features + out_features))
    w_mean = jax.random.normal(k_wm, (out_features, in_features),
                               jnp.float32) * xavier_std
    w_v = jax.random.normal(k_wv, (rank, out_features, in_features),
                            jnp.float32) * (0.5 * xavier_std)
    w_log_var = jnp.full((out_features, in_features),
                         math.log(initial_posterior_var), jnp.float32)
    b_mean = jax.random.normal(k_bm, (out_features,), jnp.float32) * 0.1
    b_v = jax.random.normal(k_bv, (rank, out_features), jnp.float32) * 0.1
    b_log_var = jnp.full((out_features,),
                         math.log(initial_posterior_var), jnp.float32)

    # Inputs + noise (torch.randn analogues, deterministic here).
    x = jax.random.normal(k_x, (batch, in_features), jnp.float32)
    eps_var = jax.random.normal(k_evar, (batch, out_features), jnp.float32)
    eps_v = jax.random.normal(k_ev, (batch, rank), jnp.float32)

    # One-time prep (transpose / exp / fuse / pad / bf16 cast), then forward.
    params = prepare_elrg_params(w_mean, w_log_var, w_v, b_mean, b_log_var,
                                 b_v, alpha)
    out = elrg_linear_forward(x, eps_var, eps_v, params)
    out = jax.block_until_ready(out)

    ref = elrg_linear_reference(x, w_mean, w_log_var, w_v, b_mean, b_log_var,
                                b_v, eps_var, eps_v, alpha)
    assert out.shape == (batch, out_features)
    # bf16 matmul operands for the mean / low-rank paths -> loosened tolerance
    # vs the pure-f32 reference (variance path is kept in f32 in the kernel).
    assert jnp.allclose(out, ref, rtol=5e-2, atol=5e-2), "mismatch vs reference"

    print("KERNEL_OK")
</pallas_src>

<mosaic_0001>
module attributes {stable_mosaic.version = 11 : i64} {
  func.func @_elrg_kernel(%arg0: i32, %arg1: i32, %arg2: i32, %arg3: memref<8x32xf32, #tpu.memory_space<vmem>>, %arg4: memref<32x384xbf16, #tpu.memory_space<vmem>>, %arg5: memref<32x128xf32, #tpu.memory_space<vmem>>, %arg6: memref<3x128xf32, #tpu.memory_space<vmem>>, %arg7: memref<1x128xf32, #tpu.memory_space<vmem>>, %arg8: memref<8x128xf32, #tpu.memory_space<vmem>>, %arg9: memref<8x2xf32, #tpu.memory_space<vmem>>, %arg10: memref<8x128xf32, #tpu.memory_space<vmem>>, %arg11: memref<8x384xf32, #tpu.memory_space<vmem>>, %arg12: memref<8x128xf32, #tpu.memory_space<vmem>>) attributes {dimension_semantics = [#tpu.dimension_semantics<parallel>, #tpu.dimension_semantics<parallel>, #tpu.dimension_semantics<arbitrary>], iteration_bounds = array<i64: 1, 1, 1>, scalar_prefetch = 0 : i64, scratch_operands = 2 : i64, tpu.core_type = #tpu.core_type<tc>, window_params = [{transform_indices = @transform_0, window_bounds = array<i64: 8, 32>}, {transform_indices = @transform_1, window_bounds = array<i64: 32, 384>}, {transform_indices = @transform_2, window_bounds = array<i64: 32, 128>}, {transform_indices = @transform_3, window_bounds = array<i64: 3, 128>}, {transform_indices = @transform_4, window_bounds = array<i64: 1, 128>}, {transform_indices = @transform_5, window_bounds = array<i64: 8, 128>}, {transform_indices = @transform_6, window_bounds = array<i64: 8, 2>}, {transform_indices = @transform_7, window_bounds = array<i64: 8, 128>}]} {
    %c0_i32 = arith.constant 0 : i32
    %0 = arith.cmpi eq, %arg2, %c0_i32 : i32
    %1 = arith.extui %0 : i1 to i32
    %c0_i32_0 = arith.constant 0 : i32
    %2 = arith.cmpi ne, %1, %c0_i32_0 : i32
    scf.if %2 {
      %cst_17 = arith.constant 0.000000e+00 : f32
      %19 = vector.broadcast %cst_17 : f32 to vector<8x384xf32>
      %c0_18 = arith.constant 0 : index
      %c0_19 = arith.constant 0 : index
      %20 = vector.load %arg11[%c0_18, %c0_19] : memref<8x384xf32, #tpu.memory_space<vmem>>, vector<8x384xf32>
      tpu.vector_store %arg11[%c0_18, %c0_19], %19 {strides = array<i32>} : memref<8x384xf32, #tpu.memory_space<vmem>>, vector<8x384xf32>,
      %cst_20 = arith.constant 0.000000e+00 : f32
      %21 = vector.broadcast %cst_20 : f32 to vector<8x128xf32>
      %c0_21 = arith.constant 0 : index
      %c0_22 = arith.constant 0 : index
      %22 = vector.load %arg12[%c0_21, %c0_22] : memref<8x128xf32, #tpu.memory_space<vmem>>, vector<8x128xf32>
      tpu.vector_store %arg12[%c0_21, %c0_22], %21 {strides = array<i32>} : memref<8x128xf32, #tpu.memory_space<vmem>>, vector<8x128xf32>,
    } else {
    }
    %c0 = arith.constant 0 : index
    %c0_1 = arith.constant 0 : index
    %3 = vector.load %arg3[%c0, %c0_1] : memref<8x32xf32, #tpu.memory_space<vmem>>, vector<8x32xf32>
    %c0_2 = arith.constant 0 : index
    %c0_3 = arith.constant 0 : index
    %4 = vector.load %arg11[%c0_2, %c0_3] : memref<8x384xf32, #tpu.memory_space<vmem>>, vector<8x384xf32>
    %5 = arith.truncf %3 : vector<8x32xf32> to vector<8x32xbf16>
    %c0_4 = arith.constant 0 : index
    %c0_5 = arith.constant 0 : index
    %6 = vector.load %arg4[%c0_4, %c0_5] : memref<32x384xbf16, #tpu.memory_space<vmem>>, vector<32x384xbf16>
    %cst = arith.constant dense<0.000000e+00> : vector<8x384xf32>
    %7 = tpu.matmul %5, %6, %cst {dimension_numbers = #tpu.dot_dimension_numbers<[1], [0], [0], [1], [0, 0, 1, 1], [], []>} : vector<8x32xbf16>, vector<32x384xbf16>, vector<8x384xf32> -> vector<8x384xf32>
    %8 = arith.addf %4, %7 : vector<8x384xf32>
    %c0_6 = arith.constant 0 : index
    %c0_7 = arith.constant 0 : index
    %9 = vector.load %arg11[%c0_6, %c0_7] : memref<8x384xf32, #tpu.memory_space<vmem>>, vector<8x384xf32>
    tpu.vector_store %arg11[%c0_6, %c0_7], %8 {strides = array<i32>} : memref<8x384xf32, #tpu.memory_space<vmem>>, vector<8x384xf32>,
    %c0_8 = arith.constant 0 : index
    %c0_9 = arith.constant 0 : index
    %10 = vector.load %arg12[%c0_8, %c0_9] : memref<8x128xf32, #tpu.memory_space<vmem>>, vector<8x128xf32>
    %11 = arith.mulf %3, %3 : vector<8x32xf32>
    %c0_10 = arith.constant 0 : index
    %c0_11 = arith.constant 0 : index
    %12 = vector.load %arg5[%c0_10, %c0_11] : memref<32x128xf32, #tpu.memory_space<vmem>>, vector<32x128xf32>
    %cst_12 = arith.constant dense<0.000000e+00> : vector<8x128xf32>
    %13 = tpu.matmul %11, %12, %cst_12 {dimension_numbers = #tpu.dot_dimension_numbers<[1], [0], [0], [1], [0, 0, 1, 1], [], []>} : vector<8x32xf32>, vector<32x128xf32>, vector<8x128xf32> -> vector<8x128xf32>
    %14 = arith.addf %10, %13 : vector<8x128xf32>
    %c0_13 = arith.constant 0 : index
    %c0_14 = arith.constant 0 : index
    %15 = vector.load %arg12[%c0_13, %c0_14] : memref<8x128xf32, #tpu.memory_space<vmem>>, vector<8x128xf32>
    tpu.vector_store %arg12[%c0_13, %c0_14], %14 {strides = array<i32>} : memref<8x128xf32, #tpu.memory_space<vmem>>, vector<8x128xf32>,
    %c0_i32_15 = arith.constant 0 : i32
    %16 = arith.cmpi eq, %arg2, %c0_i32_15 : i32
    %17 = arith.extui %16 : i1 to i32
    %c0_i32_16 = arith.constant 0 : i32
    %18 = arith.cmpi ne, %17, %c0_i32_16 : i32
    scf.if %18 {
      %c0_17 = arith.constant 0 : index
      %c0_18 = arith.constant 0 : index
      %19 = vector.load %arg11[%c0_17, %c0_18] : memref<8x384xf32, #tpu.memory_space<vmem>>, vector<8x384xf32>
      %c0_19 = arith.constant 0 : index
      %c0_20 = arith.constant 0 : index
      %20 = vector.load %arg6[%c0_19, %c0_20] : memref<3x128xf32, #tpu.memory_space<vmem>>, vector<3x128xf32>
      %c0_21 = arith.constant 0 : index
      %c0_22 = arith.constant 0 : index
      %21 = vector.load %arg9[%c0_21, %c0_22] : memref<8x2xf32, #tpu.memory_space<vmem>>, vector<8x2xf32>
      %22 = vector.extract_strided_slice %19 {offsets = [0, 0], sizes = [8, 128], strides = [1, 1]} : vector<8x384xf32> to vector<8x128xf32>
      %23 = vector.extract_strided_slice %20 {offsets = [0, 0], sizes = [1, 128], strides = [1, 1]} : vector<3x128xf32> to vector<1x128xf32>
      %24 = vector.broadcast %23 : vector<1x128xf32> to vector<8x128xf32>
      %25 = arith.addf %22, %24 : vector<8x128xf32>
      %26 = vector.extract_strided_slice %21 {offsets = [0, 0], sizes = [8, 1], strides = [1, 1]} : vector<8x2xf32> to vector<8x1xf32>
      %27 = vector.extract_strided_slice %19 {offsets = [0, 128], sizes = [8, 128], strides = [1, 1]} : vector<8x384xf32> to vector<8x128xf32>
      %28 = vector.extract_strided_slice %20 {offsets = [1, 0], sizes = [1, 128], strides = [1, 1]} : vector<3x128xf32> to vector<1x128xf32>
      %29 = vector.broadcast %28 : vector<1x128xf32> to vector<8x128xf32>
      %30 = arith.addf %27, %29 : vector<8x128xf32>
      %31 = vector.broadcast %26 : vector<8x1xf32> to vector<8x128xf32>
      %32 = arith.mulf %31, %30 : vector<8x128xf32>
      %33 = arith.addf %25, %32 : vector<8x128xf32>
      %34 = vector.extract_strided_slice %21 {offsets = [0, 1], sizes = [8, 1], strides = [1, 1]} : vector<8x2xf32> to vector<8x1xf32>
      %35 = vector.extract_strided_slice %19 {offsets = [0, 256], sizes = [8, 128], strides = [1, 1]} : vector<8x384xf32> to vector<8x128xf32>
      %36 = vector.extract_strided_slice %20 {offsets = [2, 0], sizes = [1, 128], strides = [1, 1]} : vector<3x128xf32> to vector<1x128xf32>
      %37 = vector.broadcast %36 : vector<1x128xf32> to vector<8x128xf32>
      %38 = arith.addf %35, %37 : vector<8x128xf32>
      %39 = vector.broadcast %34 : vector<8x1xf32> to vector<8x128xf32>
      %40 = arith.mulf %39, %38 : vector<8x128xf32>
      %41 = arith.addf %33, %40 : vector<8x128xf32>
      %c0_23 = arith.constant 0 : index
      %c0_24 = arith.constant 0 : index
      %42 = vector.load %arg12[%c0_23, %c0_24] : memref<8x128xf32, #tpu.memory_space<vmem>>, vector<8x128xf32>
      %c0_25 = arith.constant 0 : index
      %c0_26 = arith.constant 0 : index
      %43 = vector.load %arg7[%c0_25, %c0_26] : memref<1x128xf32, #tpu.memory_space<vmem>>, vector<1x128xf32>
      %44 = vector.broadcast %43 : vector<1x128xf32> to vector<8x128xf32>
      %45 = arith.addf %42, %44 : vector<8x128xf32>
      %c0_27 = arith.constant 0 : index
      %c0_28 = arith.constant 0 : index
      %46 = vector.load %arg8[%c0_27, %c0_28] : memref<8x128xf32, #tpu.memory_space<vmem>>, vector<8x128xf32>
      %47 = math.sqrt %45 : vector<8x128xf32>
      %48 = arith.mulf %46, %47 : vector<8x128xf32>
      %49 = arith.addf %41, %48 : vector<8x128xf32>
      %c0_29 = arith.constant 0 : index
      %c0_30 = arith.constant 0 : index
      %50 = vector.load %arg10[%c0_29, %c0_30] : memref<8x128xf32, #tpu.memory_space<vmem>>, vector<8x128xf32>
      tpu.vector_store %arg10[%c0_29, %c0_30], %49 {strides = array<i32>} : memref<8x128xf32, #tpu.memory_space<vmem>>, vector<8x128xf32>,
    } else {
    }
    return
  }
  func.func @transform_0(%arg0: i32, %arg1: i32, %arg2: i32) -> (i32, i32) {
    %c0_i32 = arith.constant 0 : i32
    return %arg0, %arg2 : i32, i32
  }
  func.func @transform_1(%arg0: i32, %arg1: i32, %arg2: i32) -> (i32, i32) {
    %c0_i32 = arith.constant 0 : i32
    return %arg2, %arg1 : i32, i32
  }
  func.func @transform_2(%arg0: i32, %arg1: i32, %arg2: i32) -> (i32, i32) {
    %c0_i32 = arith.constant 0 : i32
    return %arg2, %arg1 : i32, i32
  }
  func.func @transform_3(%arg0: i32, %arg1: i32, %arg2: i32) -> (i32, i32) {
    %c0_i32 = arith.constant 0 : i32
    %c0_i32_0 = arith.constant 0 : i32
    return %c0_i32, %arg1 : i32, i32
  }
  func.func @transform_4(%arg0: i32, %arg1: i32, %arg2: i32) -> (i32, i32) {
    %c0_i32 = arith.constant 0 : i32
    %c0_i32_0 = arith.constant 0 : i32
    return %c0_i32, %arg1 : i32, i32
  }
  func.func @transform_5(%arg0: i32, %arg1: i32, %arg2: i32) -> (i32, i32) {
    %c0_i32 = arith.constant 0 : i32
    return %arg0, %arg1 : i32, i32
  }
  func.func @transform_6(%arg0: i32, %arg1: i32, %arg2: i32) -> (i32, i32) {
    %c0_i32 = arith.constant 0 : i32
    %c0_i32_0 = arith.constant 0 : i32
    return %arg0, %c0_i32 : i32, i32
  }
  func.func @transform_7(%arg0: i32, %arg1: i32, %arg2: i32) -> (i32, i32) {
    %c0_i32 = arith.constant 0 : i32
    return %arg0, %arg1 : i32, i32
  }
}

</mosaic_0001>

<llo_original>
// kernel: tpu_custom_call.1
$region0: #{tpu_custom_call.1}
  #allocation0 [shape = 'u32[]', space=smem, size = 0x4, offset = 0x4, fixed_abs, tag = 'smem constant byte address 0x4 - core index']
  #allocation1 [shape = 'u32[144,128]{1,0:T(1,128)}', space=vmem, size = 0x12000, scoped, tag = 'internal scratch']
  #allocation2 [shape = 'f32[8,384]{1,0:T(8,128)}', space=vmem, size = 0x3000, scoped, tag = 'scratch operand']
  #allocation3 [shape = 'f32[8,128]{1,0:T(8,128)}', space=vmem, size = 0x1000, scoped, tag = 'scratch operand']
  %s0 = inlined_call_operand.vmem [shape: f32[8,32], index: 0, kind: input, shape index: {}]
  %s1 = inlined_call_operand.hbm [shape: bf16[32,384], index: 1, kind: input, shape index: {}]
  %s2 = inlined_call_operand.hbm [shape: f32[32,128], index: 2, kind: input, shape index: {}]
  %s3 = inlined_call_operand.vmem [shape: f32[3,128], index: 3, kind: input, shape index: {}]
  %s4 = inlined_call_operand.vmem [shape: f32[1,128], index: 4, kind: input, shape index: {}]
  %s5 = inlined_call_operand.vmem [shape: f32[8,128], index: 5, kind: input, shape index: {}]
  %s6 = inlined_call_operand.vmem [shape: f32[8,2], index: 6, kind: input, shape index: {}]
  %s7 = inlined_call_operand.hbm [shape: f32[8,128], index: 7, kind: output, shape index: {}]
  %s8 = sld [smem:[#allocation0]]
  $region54: #{tpu_custom_call.1} parent=0
    _
  %s10 = ssub.s32 1, %s8
  %s11 = scalar_select 0, %s10, %s8
  $region1: #{tpu_custom_call.1} parent=0
    #allocation4 [shape = 'u8[24576]{0}', space=vmem, size = 0x6000, scoped, tag = 'input window, operand 1, single buffered']
    #allocation5 [shape = 's32[1]{0}', space=sflag, size = 0x4, scoped, tag = 'scoped memory for tpu_custom_call.1']
    #allocation6 [shape = 's32[1]{0}', space=sflag, size = 0x4, scoped, tag = 'scoped memory for tpu_custom_call.1']
    #allocation7 [shape = 'u8[16384]{0}', space=vmem, size = 0x4000, scoped, tag = 'input window, operand 2, single buffered']
    #allocation8 [shape = 's32[1]{0}', space=sflag, size = 0x4, scoped, tag = 'scoped memory for tpu_custom_call.1']
    #allocation9 [shape = 'u8[4096]{0}', space=vmem, size = 0x1000, scoped, tag = 'output window, operand 0, single buffered']
    %12 = vsyncpa [#allocation5], 0
    %13 = vsyncpa [#allocation8], 0
    %14 = vsyncpa [#allocation6], 0
    // Predicated region
    $region2: #{tpu_custom_call.1} parent=1 // pred_check
      _
    $region3: #{tpu_custom_call.1} parent=1 // pred_check_branch
      %16 = sbr.rel (0) target = $region5
    $region4: #{tpu_custom_call.1} parent=1 // pred_region
      _
    $region5: #{tpu_custom_call.1} parent=1 // pred_fallthru
      _
    // Predicated region
    $region6: #{tpu_custom_call.1} parent=1 // pred_check
      _
    $region7: #{tpu_custom_call.1} parent=1 // pred_check_branch
      %18 = sbr.rel (0) target = $region9
    $region8: #{tpu_custom_call.1} parent=1 // pred_region
      %s20 = ssub.s32 768, 768
      %21 = vsyncadd [#allocation5], %s20
      %s22 = sshll.u32 [#allocation4], 4
      %s23 = int_to_ptr.vmem [resolvable:$true] %s22
      %28 = dma.hbm_to_vmem [thread:$0]  %s1, 768, %s23, [#allocation5], 192, 192, 12
    $region9: #{tpu_custom_call.1} parent=1 // pred_fallthru
      _
    // Predicated region
    $region10: #{tpu_custom_call.1} parent=1 // pred_check
      _
    $region11: #{tpu_custom_call.1} parent=1 // pred_check_branch
      %30 = sbr.rel (0) target = $region13
    $region12: #{tpu_custom_call.1} parent=1 // pred_region
      %s32 = ssub.s32 512, 512
      %33 = vsyncadd [#allocation8], %s32
      %s34 = sshll.u32 [#allocation7], 4
      %s35 = int_to_ptr.vmem [resolvable:$true] %s34
      %40 = dma.hbm_to_vmem [thread:$0]  %s2, 512, %s35, [#allocation8], 128, 128, 8
    $region13: #{tpu_custom_call.1} parent=1 // pred_fallthru
      _
    // Predicated region
    $region14: #{tpu_custom_call.1} parent=1 // pred_check
      _
    $region15: #{tpu_custom_call.1} parent=1 // pred_check_branch
      %42 = sbr.rel (0) target = $region17
    $region16: #{tpu_custom_call.1} parent=1 // pred_region
      _
    $region17: #{tpu_custom_call.1} parent=1 // pred_fallthru
      _
    // Predicated region
    $region18: #{tpu_custom_call.1} parent=1 // pred_check
      _
    $region19: #{tpu_custom_call.1} parent=1 // pred_check_branch
      %44 = sbr.rel (0) target = $region21
    $region20: #{tpu_custom_call.1} parent=1 // pred_region
      _
    $region21: #{tpu_custom_call.1} parent=1 // pred_fallthru
      _
    // Predicated region
    $region22: #{tpu_custom_call.1} parent=1 // pred_check
      _
    $region23: #{tpu_custom_call.1} parent=1 // pred_check_branch
      %46 = sbr.rel (0) target = $region25
    $region24: #{tpu_custom_call.1} parent=1 // pred_region
      _
    $region25: #{tpu_custom_call.1} parent=1 // pred_fallthru
      _
    // Predicated region
    $region26: #{tpu_custom_call.1} parent=1 // pred_check
      _
    $region27: #{tpu_custom_call.1} parent=1 // pred_check_branch
      %48 = sbr.rel (0) target = $region29
    $region28: #{tpu_custom_call.1} parent=1 // pred_region
      _
    $region29: #{tpu_custom_call.1} parent=1 // pred_fallthru
      _
    // Predicated region
    $region30: #{tpu_custom_call.1} parent=1 // pred_check
      _
    $region31: #{tpu_custom_call.1} parent=1 // pred_check_branch
      %50 = sbr.rel (0) target = $region33
    $region32: #{tpu_custom_call.1} parent=1 // pred_region
      %51 = dma.done [#allocation5], 768
    $region33: #{tpu_custom_call.1} parent=1 // pred_fallthru
      _
    // Predicated region
    $region34: #{tpu_custom_call.1} parent=1 // pred_check
      _
    $region35: #{tpu_custom_call.1} parent=1 // pred_check_branch
      %53 = sbr.rel (0) target = $region37
    $region36: #{tpu_custom_call.1} parent=1 // pred_region
      %54 = dma.done [#allocation8], 512
    $region37: #{tpu_custom_call.1} parent=1 // pred_fallthru
      _
    %p56 = scmp.eq.s32.totalorder 0, 0
    // Predicated region
    $region38: #{tpu_custom_call.1} parent=1 // pred_check
      %p57 = pneg %p56
    $region39: #{tpu_custom_call.1} parent=1 // pred_check_branch
      %59 = sbr.rel (%p57) target = $region41
    $region40: #{tpu_custom_call.1} parent=1 // pred_region
      %60 = vst [vmem:[#allocation2] sm:$0xff] 0.0
      %61 = vst [vmem:[#allocation2 + $0x8] sm:$0xff] 0.0
      %62 = vst [vmem:[#allocation2 + $0x10] sm:$0xff] 0.0
      %63 = vst [vmem:[#allocation3] sm:$0xff] 0.0
    $region41: #{tpu_custom_call.1} parent=1 // pred_fallthru
      _
    %v64 = vld [vmem:[%s0] sm:$0xff]
    %v65 = vld [vmem:[#allocation2] sm:$0xff]
    %v66 = vld [vmem:[#allocation2 + $0x8] sm:$0xff]
    %v67 = vld [vmem:[#allocation2 + $0x10] sm:$0xff]
    %v68 = vpack.c.bf16 %v64, %v64
    %v69 = vld [vmem:[#allocation4] sm:$0xff]
    %v70 = vld [vmem:[#allocation4 + $0x8] sm:$0xf]
    %v71 = vld [vmem:[#allocation4 + $0xc] sm:$0xff]
    %v72 = vld [vmem:[#allocation4 + $0x14] sm:$0xf]
    %v73 = vld [vmem:[#allocation4 + $0x18] sm:$0xff]
    %v74 = vld [vmem:[#allocation4 + $0x20] sm:$0xf]
    %v75 = vld [vmem:[#allocation4 + $0x24] sm:$0xff]
    %v76 = vld [vmem:[#allocation4 + $0x2c] sm:$0xf]
    %v85 = vunpack.c.l.b16 %v69
    %v86 = vunpack.c.h.b16 %v69
    %v87 = vunpack.c.l.b16 %v70
    %v88 = vunpack.c.l.b16 %v71
    %v89 = vunpack.c.h.b16 %v71
    %v90 = vunpack.c.l.b16 %v72
    %v91 = vunpack.c.l.b16 %v73
    %v92 = vunpack.c.h.b16 %v73
    %v93 = vunpack.c.l.b16 %v74
    %v94 = vunpack.c.l.b16 %v75
    %v95 = vunpack.c.h.b16 %v75
    %v96 = vunpack.c.l.b16 %v76
    %v97 = vpack.c.b16 %v88, %v85
    %v98 = vpack.c.b16 %v89, %v86
    %v99 = vpack.c.b16 %v90, %v87
    %v100 = vpack.c.b16 %v94, %v91
    %v101 = vpack.c.b16 %v95, %v92
    %v102 = vpack.c.b16 %v96, %v93
    %vm109 = vcmask 261120
    %v111 = vsel %vm109, %v68, 0
    %113 = vmatprep.subr.bf16.mxu0 %v98
    %114 = vmatpush1.bf16.msra.mxu0 %v97
    %115 = vmatprep.subr.bf16.mxu0 %v101
    %116 = vmatpush1.bf16.msra.mxu0 %v100
    %117 = vmatprep.subr.bf16.mxu0 0
    %118 = vmatpush1.bf16.msra.mxu0 0
    %119 = vmatprep.subr.bf16.mxu0 0
    %120 = vmatpush1.bf16.msra.mxu0 0
    %121 = vmatprep.subr.bf16.mxu0 0
    %122 = vmatpush1.bf16.msra.mxu0 0
    %123 = vmatprep.subr.bf16.mxu0 0
    %124 = vmatpush1.bf16.msra.mxu0 0
    %125 = vmatprep.subr.bf16.mxu0 0
    %126 = vmatpush1.bf16.msra.mxu0 0
    %127 = vmatprep.subr.bf16.mxu0 0
    %128 = vmatpush1.bf16.msra.mxu0 0
    %129 = vmatprep.subr.bf16.mxu0 0
    %130 = vmatpush1.bf16.msra.mxu0 0
    %131 = vmatprep.subr.bf16.mxu0 0
    %132 = vmatpush1.bf16.msra.mxu0 0
    %133 = vmatprep.subr.bf16.mxu0 0
    %134 = vmatpush1.bf16.msra.mxu0 0
    %135 = vmatprep.subr.bf16.mxu0 0
    %136 = vmatpush1.bf16.msra.mxu0 0
    %137 = vmatprep.subr.bf16.mxu0 0
    %138 = vmatpush1.bf16.msra.mxu0 0
    %139 = vmatprep.subr.bf16.mxu0 0
    %140 = vmatpush1.bf16.msra.mxu0 0
    %141 = vmatprep.subr.bf16.mxu0 0
    %142 = vmatpush1.bf16.msra.mxu0 0
    %143 = vmatprep.subr.bf16.mxu0 0
    %144 = vmatpush1.bf16.msra.mxu0 0
    %145 = vmatprep.mubr.bf16.mxu0 0
    %146 = vmatmul.mubr.bf16.gmra.mrb[0].mxu0 %v111
    %v147 = vpop.f32.mrb[0].mxu0
    %v148 = vadd.f32 0.0, %v147
    %v149 = vpop.f32.mrb[0].mxu0
    %v150 = vadd.f32 0.0, %v149
    %v151 = vpop.f32.mrb[0].mxu0
    %v152 = vpop.f32.mrb[0].mxu0
    %153 = vdwg.mxu0
    %154 = vmatprep.subr.bf16.mxu0 0
    %155 = vmatpush1.bf16.msra.mxu0 %v99
    %156 = vmatprep.subr.bf16.mxu0 0
    %157 = vmatpush1.bf16.msra.mxu0 %v102
    %158 = vmatprep.subr.bf16.mxu0 0
    %159 = vmatpush1.bf16.msra.mxu0 0
    %160 = vmatprep.subr.bf16.mxu0 0
    %161 = vmatpush1.bf16.msra.mxu0 0
    %162 = vmatprep.subr.bf16.mxu0 0
    %163 = vmatpush1.bf16.msra.mxu0 0
    %164 = vmatprep.subr.bf16.mxu0 0
    %165 = vmatpush1.bf16.msra.mxu0 0
    %166 = vmatprep.subr.bf16.mxu0 0
    %167 = vmatpush1.bf16.msra.mxu0 0
    %168 = vmatprep.subr.bf16.mxu0 0
    %169 = vmatpush1.bf16.msra.mxu0 0
    %170 = vmatprep.subr.bf16.mxu0 0
    %171 = vmatpush1.bf16.msra.mxu0 0
    %172 = vmatprep.subr.bf16.mxu0 0
    %173 = vmatpush1.bf16.msra.mxu0 0
    %174 = vmatprep.subr.bf16.mxu0 0
    %175 = vmatpush1.bf16.msra.mxu0 0
    %176 = vmatprep.subr.bf16.mxu0 0
    %177 = vmatpush1.bf16.msra.mxu0 0
    %178 = vmatprep.subr.bf16.mxu0 0
    %179 = vmatpush1.bf16.msra.mxu0 0
    %180 = vmatprep.subr.bf16.mxu0 0
    %181 = vmatpush1.bf16.msra.mxu0 0
    %182 = vmatprep.subr.bf16.mxu0 0
    %183 = vmatpush1.bf16.msra.mxu0 0
    %184 = vmatprep.subr.bf16.mxu0 0
    %185 = vmatpush1.bf16.msra.mxu0 0
    %186 = vmatprep.mubr.bf16.mxu0 0
    %187 = vmatmul.mubr.bf16.gmra.mrb[0].mxu0 %v111
    %v188 = vpop.f32.mrb[0].mxu0
    %v189 = vadd.f32 0.0, %v188
    %v190 = vpop.f32.mrb[0].mxu0
    %v191 = vpop.f32.mrb[0].mxu0
    %v192 = vpop.f32.mrb[0].mxu0
    %193 = vdwg.mxu0
    %v194 = vadd.f32 %v65, %v148
    %v195 = vadd.f32 %v66, %v150
    %v196 = vadd.f32 %v67, %v189
    %197 = vst [vmem:[#allocation2] sm:$0xff] %v194
    %198 = vst [vmem:[#allocation2 + $0x8] sm:$0xff] %v195
    %199 = vst [vmem:[#allocation2 + $0x10] sm:$0xff] %v196
    %v200 = vld [vmem:[#allocation3] sm:$0xff]
    %v201 = vmul.f32 %v64, %v64
    %v202 = vld [vmem:[#allocation7] sm:$0xff]
    %v203 = vld [vmem:[#allocation7 + $0x8] sm:$0xff]
    %v204 = vld [vmem:[#allocation7 + $0x10] sm:$0xff]
    %v205 = vld [vmem:[#allocation7 + $0x18] sm:$0xff]
    %v207 = vsel %vm109, %v201, 0
    %209 = vmatprep.subr.mxu0 0.0
    %210 = vmatpush1.msra.mxu0 %v202
    %211 = vmatprep.subr.mxu0 0.0
    %212 = vmatpush1.msra.mxu0 %v203
    %213 = vmatprep.subr.mxu0 0.0
    %214 = vmatpush1.msra.mxu0 %v204
    %215 = vmatprep.subr.mxu0 0.0
    %216 = vmatpush1.msra.mxu0 %v205
    %217 = vmatprep.subr.mxu0 0.0
    %218 = vmatpush1.msra.mxu0 0.0
    %219 = vmatprep.subr.mxu0 0.0
    %220 = vmatpush1.msra.mxu0 0.0
    %221 = vmatprep.subr.mxu0 0.0
    %222 = vmatpush1.msra.mxu0 0.0
    %223 = vmatprep.subr.mxu0 0.0
    %224 = vmatpush1.msra.mxu0 0.0
    %225 = vmatprep.subr.mxu0 0.0
    %226 = vmatpush1.msra.mxu0 0.0
    %227 = vmatprep.subr.mxu0 0.0
    %228 = vmatpush1.msra.mxu0 0.0
    %229 = vmatprep.subr.mxu0 0.0
    %230 = vmatpush1.msra.mxu0 0.0
    %231 = vmatprep.subr.mxu0 0.0
    %232 = vmatpush1.msra.mxu0 0.0
    %233 = vmatprep.subr.mxu0 0.0
    %234 = vmatpush1.msra.mxu0 0.0
    %235 = vmatprep.subr.mxu0 0.0
    %236 = vmatpush1.msra.mxu0 0.0
    %237 = vmatprep.subr.mxu0 0.0
    %238 = vmatpush1.msra.mxu0 0.0
    %239 = vmatprep.subr.mxu0 0.0
    %240 = vmatpush1.msra.mxu0 0.0
    %241 = vmatprep.subr.mxu0 0.0
    %242 = vmatpush1.msra.mxu0 0.0
    %243 = vmatprep.subr.mxu0 0.0
    %244 = vmatpush1.msra.mxu0 0.0
    %245 = vmatprep.subr.mxu0 0.0
    %246 = vmatpush1.msra.mxu0 0.0
    %247 = vmatprep.subr.mxu0 0.0
    %248 = vmatpush1.msra.mxu0 0.0
    %249 = vmatprep.subr.mxu0 0.0
    %250 = vmatpush1.msra.mxu0 0.0
    %251 = vmatprep.subr.mxu0 0.0
    %252 = vmatpush1.msra.mxu0 0.0
    %253 = vmatprep.subr.mxu0 0.0
    %254 = vmatpush1.msra.mxu0 0.0
    %255 = vmatprep.subr.mxu0 0.0
    %256 = vmatpush1.msra.mxu0 0.0
    %257 = vmatprep.subr.mxu0 0.0
    %258 = vmatpush1.msra.mxu0 0.0
    %259 = vmatprep.subr.mxu0 0.0
    %260 = vmatpush1.msra.mxu0 0.0
    %261 = vmatprep.subr.mxu0 0.0
    %262 = vmatpush1.msra.mxu0 0.0
    %263 = vmatprep.subr.mxu0 0.0
    %264 = vmatpush1.msra.mxu0 0.0
    %265 = vmatprep.subr.mxu0 0.0
    %266 = vmatpush1.msra.mxu0 0.0
    %267 = vmatprep.subr.mxu0 0.0
    %268 = vmatpush1.msra.mxu0 0.0
    %269 = vmatprep.subr.mxu0 0.0
    %270 = vmatpush1.msra.mxu0 0.0
    %271 = vmatprep.subr.mxu0 0.0
    %272 = vmatpush1.msra.mxu0 0.0
    %273 = vmatprep.mubr.f32.mxu0 0.0
    %274 = vmatmul.mubr.f32.gmra.mrb[0].mxu0 %v207
    %v275 = vpop.f32.mrb[0].mxu0
    %v276 = vadd.f32 0.0, %v275
    %v277 = vpop.f32.mrb[0].mxu0
    %278 = vdwg.mxu0
    %v279 = vadd.f32 %v200, %v276
    %280 = vst [vmem:[#allocation3] sm:$0xff] %v279
    // Predicated region
    $region42: #{tpu_custom_call.1} parent=1 // pred_check
      %p281 = pneg %p56
    $region43: #{tpu_custom_call.1} parent=1 // pred_check_branch
      %283 = sbr.rel (%p281) target = $region45
    $region44: #{tpu_custom_call.1} parent=1 // pred_region
      %v284 = vld [vmem:[#allocation2] sm:$0xff]
      %v285 = vld [vmem:[#allocation2 + $0x8] sm:$0xff]
      %v286 = vld [vmem:[#allocation2 + $0x10] sm:$0xff]
      %v287 = vld [vmem:[%s3] sm:$0x7]
      %v288 = vld [vmem:[%s6] sm:$0xff]
      %v289 = vlaneseq
      %v290 = vshrl.u32 %v289, 7
      %v291 = vsub.s32 0, %v290
      %v292 = vrot.slane %v287, %v291
      %v293 = vadd.f32 %v284, %v292
      %v294 = vlaneseq
      %v295 = vshrl.u32 %v294, 7
      %v296 = vsub.s32 1, %v295
      %v297 = vrot.slane %v287, %v296
      %v298 = vadd.f32 %v285, %v297
      %300 = vset.pattern.permute.xlu0 0
      %301 = vperm.xlu0 %300, %v288
      %v302 = vpop.permute.xlu0 %301
      %v304 = vmul.f32 %v302, %v298
      %v305 = vadd.f32 %v293, %v304
      %v306 = vlaneseq
      %v307 = vshrl.u32 %v306, 7
      %v308 = vsub.s32 2, %v307
      %v309 = vrot.slane %v287, %v308
      %v310 = vadd.f32 %v286, %v309
      %311 = vset.pattern.permute.xlu0 1
      %312 = vperm.xlu0 %311, %v288
      %v313 = vpop.permute.xlu0 %312
      %v315 = vmul.f32 %v313, %v310
      %v316 = vadd.f32 %v305, %v315
      %v317 = vld [vmem:[#allocation3] sm:$0xff]
      %v318 = vld [vmem:[%s4] sm:$0x1]
      %v320 = vlaneseq
      %v321 = vshrl.u32 %v320, 7
      %v322 = vsub.s32 0, %v321
      %v323 = vrot.slane %v318, %v322
      %v325 = vadd.f32 %v317, %v323
      %v326 = vld [vmem:[%s5] sm:$0xff]
      %v327 = vrsqrt.pop %v325
      %v328 = vmul.f32 %v325, %v327
      %vm329 = vcmp.eq.f32.partialorder %v325, inf
      %v330 = vsel %vm329, %v325, %v328
      %vm331 = vcmp.eq.f32.partialorder %v325, 0.0
      %v332 = vand.u32 %v325, 2147483648
      %v333 = vsel %vm331, %v332, %v330
      %v334 = vmul.f32 %v326, %v333
      %v335 = vadd.f32 %v316, %v334
      %336 = vst [vmem:[#allocation9] sm:$0xff] %v335
    $region45: #{tpu_custom_call.1} parent=1 // pred_fallthru
      _
    // Predicated region
    $region46: #{tpu_custom_call.1} parent=1 // pred_check
      _
    $region47: #{tpu_custom_call.1} parent=1 // pred_check_branch
      %338 = sbr.rel (0) target = $region49
    $region48: #{tpu_custom_call.1} parent=1 // pred_region
      %s340 = ssub.s32 128, 128
      %341 = vsyncadd [#allocation6], %s340
      %s343 = sshll.u32 [#allocation9], 4
      %s344 = int_to_ptr.vmem [resolvable:$true] %s343
      %346 = dma.vmem_to_hbm [thread:$0]  %s344, 128, %s7, [#allocation6]
    $region49: #{tpu_custom_call.1} parent=1 // pred_fallthru
      _
    // Predicated region
    $region50: #{tpu_custom_call.1} parent=1 // pred_check
      _
    $region51: #{tpu_custom_call.1} parent=1 // pred_check_branch
      %348 = sbr.rel (0) target = $region53
    $region52: #{tpu_custom_call.1} parent=1 // pred_region
      %349 = dma.done [#allocation6], 128
    $region53: #{tpu_custom_call.1} parent=1 // pred_fallthru
      _
    %350 = vsyncpa [#allocation5], 1
    %351 = vsyncpa [#allocation8], 1
    %352 = vsyncpa [#allocation6], 1

</llo_original>
